<compile_context>
chip_gen: v5e
topology: v5e:2x2
jax: 0.10.0
libtpu: 0.0.40
codegen_flags: <defaults>
</compile_context>

<pallas_src>
import jax
import jax.numpy as jnp
from jax.experimental import pallas as pl
from jax.experimental.pallas import tpu as pltpu

EPS = 1e-5  # PyTorch InstanceNorm2d default eps (affine=False, no running stats)


def _make_resnet_block_kernel(B, H, W, C):
    WC = W * C
    HP = H + 2            # per-image padded height
    R = B * HP            # padded slab rows
    inv_hw = 1.0 / float(H * W)
    w_pow2 = (W & (W - 1)) == 0

    def fold_w(s):
        # Per-channel sum over W in the lane-dense layout (lane index = w*C + c).
        # Cyclic lane rotations by multiples of C keep channels aligned; rolls run
        # in the XLU slot so this stays off the MXU/VPU critical path.
        if w_pow2:
            shift = C
            while shift < WC:
                s = s + pltpu.roll(s, shift=shift, axis=1)
                shift *= 2
            return s
        out = s
        for j in range(1, W):
            out = out + pltpu.roll(s, shift=j * C, axis=1)
        return out

    def kernel(x_ref, w1_ref, w2_ref, o_ref, xp_ref):
        x = x_ref[...]                                  # (B, H, WC) f32
        zrow = jnp.zeros((1, WC), jnp.float32)

        def scatter(get_img):
            # Write each image's rows plus its zero H-border into the padded slab.
            for i in range(B):
                base = i * HP
                xp_ref[base:base + 1, :] = zrow
                xp_ref[base + 1:base + 1 + H, :] = get_img(i)
                xp_ref[base + 1 + H:base + 2 + H, :] = zrow

        def conv(w_ref):
            # Whole-slab 3x3 conv: three (R-2, WC)x(WC, WC) bf16 matmuls with f32
            # accumulation.  W-padding is inside the block-Toeplitz weights,
            # H-padding / image isolation is the zero border rows.  Result rows at
            # border positions are garbage and never read.
            lhs0 = xp_ref[0:R - 2, :].astype(jnp.bfloat16)
            lhs1 = xp_ref[1:R - 1, :].astype(jnp.bfloat16)
            lhs2 = xp_ref[2:R, :].astype(jnp.bfloat16)
            acc = jnp.dot(lhs0, w_ref[0], preferred_element_type=jnp.float32)
            acc = acc + jnp.dot(lhs1, w_ref[1], preferred_element_type=jnp.float32)
            acc = acc + jnp.dot(lhs2, w_ref[2], preferred_element_type=jnp.float32)
            return acc                                  # (R-2, WC) f32

        def inorm(h):
            # One-pass InstanceNorm (biased variance, eps=1e-5), statistics in f32:
            # sublane reduce over H, then per-channel fold over W via lane rolls.
            s = jnp.concatenate(
                [jnp.sum(h, axis=0, keepdims=True),
                 jnp.sum(h * h, axis=0, keepdims=True)], axis=0)   # (2, WC)
            folded = fold_w(s) * inv_hw
            mean = folded[0:1, :]
            var = folded[1:2, :] - mean * mean
            return (h - mean) * jax.lax.rsqrt(var + EPS)

        # stage 1: conv -> IN -> ReLU   (conv bias omitted: a per-channel bias is
        # exactly cancelled by InstanceNorm2d(affine=False))
        scatter(lambda i: x[i])
        acc1 = conv(w1_ref)
        h1 = [jnp.maximum(inorm(acc1[i * HP:i * HP + H, :]), 0.0) for i in range(B)]

        # stage 2: conv -> IN, then residual add; intermediate never leaves VMEM
        scatter(lambda i: h1[i])
        acc2 = conv(w2_ref)
        for i in range(B):
            o_ref[i] = x[i] + inorm(acc2[i * HP:i * HP + H, :])

    return kernel


def _build_toeplitz_weight(w_oihw, W):
    """(Cout, Cin, 3, 3) PyTorch weights -> (3, W*Cin, W*Cout) block-Toeplitz.

    big[kh, wp*Cin + ci, w*Cout + co] = w[co, ci, kh, kw] with kw = wp - w + 1,
    zero outside |wp - w| <= 1 (this bakes the W-direction zero padding in).
    """
    w_hwio = jnp.transpose(w_oihw, (2, 3, 1, 0)).astype(jnp.float32)   # (kh, kw, Ci, Co)
    KH, KW, Cin, Cout = w_hwio.shape
    p = jnp.arange(W)[None, :, None]
    w = jnp.arange(W)[None, None, :]
    d = jnp.arange(KW)[:, None, None]
    sel = (p == w + d - 1).astype(jnp.float32)                         # (kw, Wp, W)
    big = jnp.einsum('dpw,adio->apiwo', sel, w_hwio)                   # (kh, Wp, Ci, W, Co)
    return big.reshape(KH, W * Cin, W * Cout)


def _images_per_step(N):
    # Batch images per grid step to fill MXU M and amortize per-step overhead;
    # keep >= 2 grid steps when N allows so the "parallel" batch axis can still
    # shard across both v7x TensorCores.
    if N >= 4 and N % 2 == 0:
        return N // 2
    return N


def resnet_block_forward(x_nchw, w1, b1, w2, b2):
    """x_nchw: (N, C, H, W) f32; w*: (C, C, 3, 3) PyTorch OIHW; b*: (C,)."""
    # Per-channel conv biases are a mathematical no-op in front of
    # InstanceNorm2d(affine=False): the mean subtraction cancels them exactly.
    del b1, b2
    N, C, H, W = x_nchw.shape
    WC = W * C
    B = _images_per_step(N)
    assert N % B == 0

    # one-time wrapper-side layout plumbing: lane-dense (H, W*C) images and
    # bf16 block-Toeplitz conv weights.
    x_flat = jnp.transpose(x_nchw, (0, 2, 3, 1)).astype(jnp.float32).reshape(N, H, WC)
    w1_big = _build_toeplitz_weight(w1, W).astype(jnp.bfloat16)
    w2_big = _build_toeplitz_weight(w2, W).astype(jnp.bfloat16)

    kernel = _make_resnet_block_kernel(B, H, W, C)
    y_flat = pl.pallas_call(
        kernel,
        out_shape=jax.ShapeDtypeStruct((N, H, WC), jnp.float32),
        grid=(N // B,),
        in_specs=[
            pl.BlockSpec((B, H, WC), lambda n: (n, 0, 0)),    # B images, lane-dense
            pl.BlockSpec((3, WC, WC), lambda n: (0, 0, 0)),   # conv1 Toeplitz (bf16)
            pl.BlockSpec((3, WC, WC), lambda n: (0, 0, 0)),   # conv2 Toeplitz (bf16)
        ],
        out_specs=pl.BlockSpec((B, H, WC), lambda n: (n, 0, 0)),
        scratch_shapes=[pltpu.VMEM((B * (H + 2), WC), jnp.float32)],
        compiler_params=pltpu.CompilerParams(
            dimension_semantics=("parallel",)),  # batch steps are independent
    )(x_flat, w1_big, w2_big)

    y = y_flat.reshape(N, H, W, C)
    return jnp.transpose(y, (0, 3, 1, 2))   # back to NCHW


def _reference_forward(x_nchw, w1, b1, w2, b2):
    """Pure-JAX reference (NHWC conv, with biases) for correctness checking."""
    C = x_nchw.shape[1]
    x = jnp.transpose(x_nchw, (0, 2, 3, 1)).astype(jnp.float32)

    def conv(h, w_oihw, b):
        w_hwio = jnp.transpose(w_oihw, (2, 3, 1, 0)).astype(jnp.float32)
        out = jax.lax.conv_general_dilated(
            h, w_hwio, window_strides=(1, 1), padding="SAME",
            dimension_numbers=("NHWC", "HWIO", "NHWC"))
        return out + b.reshape(1, 1, 1, C)

    def inorm(h):
        m = jnp.mean(h, axis=(1, 2), keepdims=True)
        v = jnp.mean((h - m) ** 2, axis=(1, 2), keepdims=True)
        return (h - m) * jax.lax.rsqrt(v + EPS)

    h = jnp.maximum(inorm(conv(x, w1, b1)), 0.0)
    h = inorm(conv(h, w2, b2))
    y = x + h
    return jnp.transpose(y, (0, 3, 1, 2))


if __name__ == "__main__":
    key = jax.random.PRNGKey(0)
    N, C, H, W = 2, 8, 16, 16
    k_x, k_w1, k_b1, k_w2, k_b2 = jax.random.split(key, 5)

    x = jax.random.normal(k_x, (N, C, H, W), jnp.float32)

    # deterministic parameter init (PyTorch Conv2d-style uniform bound)
    fan_in = C * 3 * 3
    bound = 1.0 / (fan_in ** 0.5)
    w1 = jax.random.uniform(k_w1, (C, C, 3, 3), jnp.float32, -bound, bound)
    b1 = jax.random.uniform(k_b1, (C,), jnp.float32, -bound, bound)
    w2 = jax.random.uniform(k_w2, (C, C, 3, 3), jnp.float32, -bound, bound)
    b2 = jax.random.uniform(k_b2, (C,), jnp.float32, -bound, bound)

    y = resnet_block_forward(x, w1, b1, w2, b2)
    y = jax.block_until_ready(y)

    y_ref = jax.block_until_ready(_reference_forward(x, w1, b1, w2, b2))
    assert y.shape == (N, C, H, W)
    max_err = float(jnp.max(jnp.abs(y - y_ref)))
    # bf16 MXU operands (f32 accumulation / f32 IN statistics) -> relaxed tolerance
    assert max_err < 5e-2, f"mismatch vs reference: max abs err {max_err}"

    print("KERNEL_OK")
</pallas_src>

<mosaic_0001>
module attributes {stable_mosaic.version = 11 : i64} {
  func.func @kernel(%arg0: i32, %arg1: memref<2x16x128xf32, #tpu.memory_space<vmem>>, %arg2: memref<3x128x128xbf16, #tpu.memory_space<vmem>>, %arg3: memref<3x128x128xbf16, #tpu.memory_space<vmem>>, %arg4: memref<2x16x128xf32, #tpu.memory_space<vmem>>, %arg5: memref<36x128xf32, #tpu.memory_space<vmem>>) attributes {dimension_semantics = [#tpu.dimension_semantics<parallel>], iteration_bounds = array<i64: 1>, scalar_prefetch = 0 : i64, scratch_operands = 1 : i64, tpu.core_type = #tpu.core_type<tc>, window_params = [{transform_indices = @transform_0, window_bounds = array<i64: 2, 16, 128>}, {pipeline_mode = #tpu.pipeline_mode<synchronous>, transform_indices = @transform_1, window_bounds = array<i64: 3, 128, 128>}, {pipeline_mode = #tpu.pipeline_mode<synchronous>, transform_indices = @transform_2, window_bounds = array<i64: 3, 128, 128>}, {transform_indices = @transform_3, window_bounds = array<i64: 2, 16, 128>}]} {
    %c0 = arith.constant 0 : index
    %c0_0 = arith.constant 0 : index
    %c0_1 = arith.constant 0 : index
    %0 = vector.load %arg1[%c0, %c0_0, %c0_1] : memref<2x16x128xf32, #tpu.memory_space<vmem>>, vector<2x16x128xf32>
    %cst = arith.constant 0.000000e+00 : f32
    %1 = vector.broadcast %cst : f32 to vector<1x128xf32>
    %c0_2 = arith.constant 0 : index
    %c0_3 = arith.constant 0 : index
    %2 = vector.load %arg5[%c0_2, %c0_3] : memref<36x128xf32, #tpu.memory_space<vmem>>, vector<1x128xf32>
    tpu.vector_store %arg5[%c0_2, %c0_3], %1 {strides = array<i32>} : memref<36x128xf32, #tpu.memory_space<vmem>>, vector<1x128xf32>,
    %3 = vector.extract_strided_slice %0 {offsets = [0, 0, 0], sizes = [1, 16, 128], strides = [1, 1, 1]} : vector<2x16x128xf32> to vector<1x16x128xf32>
    %4 = vector.shape_cast %3 : vector<1x16x128xf32> to vector<16x128xf32>
    %c1 = arith.constant 1 : index
    %c0_4 = arith.constant 0 : index
    %5 = vector.load %arg5[%c1, %c0_4] : memref<36x128xf32, #tpu.memory_space<vmem>>, vector<16x128xf32>
    tpu.vector_store %arg5[%c1, %c0_4], %4 {strides = array<i32>} : memref<36x128xf32, #tpu.memory_space<vmem>>, vector<16x128xf32>,
    %c17 = arith.constant 17 : index
    %c0_5 = arith.constant 0 : index
    %6 = vector.load %arg5[%c17, %c0_5] : memref<36x128xf32, #tpu.memory_space<vmem>>, vector<1x128xf32>
    tpu.vector_store %arg5[%c17, %c0_5], %1 {strides = array<i32>} : memref<36x128xf32, #tpu.memory_space<vmem>>, vector<1x128xf32>,
    %c18 = arith.constant 18 : index
    %c0_6 = arith.constant 0 : index
    %7 = vector.load %arg5[%c18, %c0_6] : memref<36x128xf32, #tpu.memory_space<vmem>>, vector<1x128xf32>
    tpu.vector_store %arg5[%c18, %c0_6], %1 {strides = array<i32>} : memref<36x128xf32, #tpu.memory_space<vmem>>, vector<1x128xf32>,
    %8 = vector.extract_strided_slice %0 {offsets = [1, 0, 0], sizes = [1, 16, 128], strides = [1, 1, 1]} : vector<2x16x128xf32> to vector<1x16x128xf32>
    %9 = vector.shape_cast %8 : vector<1x16x128xf32> to vector<16x128xf32>
    %c19 = arith.constant 19 : index
    %c0_7 = arith.constant 0 : index
    %10 = vector.load %arg5[%c19, %c0_7] : memref<36x128xf32, #tpu.memory_space<vmem>>, vector<16x128xf32>
    tpu.vector_store %arg5[%c19, %c0_7], %9 {strides = array<i32>} : memref<36x128xf32, #tpu.memory_space<vmem>>, vector<16x128xf32>,
    %c35 = arith.constant 35 : index
    %c0_8 = arith.constant 0 : index
    %11 = vector.load %arg5[%c35, %c0_8] : memref<36x128xf32, #tpu.memory_space<vmem>>, vector<1x128xf32>
    tpu.vector_store %arg5[%c35, %c0_8], %1 {strides = array<i32>} : memref<36x128xf32, #tpu.memory_space<vmem>>, vector<1x128xf32>,
    %c0_9 = arith.constant 0 : index
    %c0_10 = arith.constant 0 : index
    %12 = vector.load %arg5[%c0_9, %c0_10] : memref<36x128xf32, #tpu.memory_space<vmem>>, vector<34x128xf32>
    %13 = arith.truncf %12 : vector<34x128xf32> to vector<34x128xbf16>
    %c1_11 = arith.constant 1 : index
    %c0_12 = arith.constant 0 : index
    %14 = vector.load %arg5[%c1_11, %c0_12] : memref<36x128xf32, #tpu.memory_space<vmem>>, vector<34x128xf32>
    %15 = arith.truncf %14 : vector<34x128xf32> to vector<34x128xbf16>
    %c2 = arith.constant 2 : index
    %c0_13 = arith.constant 0 : index
    %16 = vector.load %arg5[%c2, %c0_13] : memref<36x128xf32, #tpu.memory_space<vmem>>, vector<34x128xf32>
    %17 = arith.truncf %16 : vector<34x128xf32> to vector<34x128xbf16>
    %c0_14 = arith.constant 0 : index
    %c0_15 = arith.constant 0 : index
    %c0_16 = arith.constant 0 : index
    %18 = vector.load %arg2[%c0_14, %c0_15, %c0_16] : memref<3x128x128xbf16, #tpu.memory_space<vmem>>, vector<1x128x128xbf16>
    %19 = vector.shape_cast %18 : vector<1x128x128xbf16> to vector<128x128xbf16>
    %cst_17 = arith.constant dense<0.000000e+00> : vector<34x128xf32>
    %20 = tpu.matmul %13, %19, %cst_17 {dimension_numbers = #tpu.dot_dimension_numbers<[1], [0], [0], [1], [0, 0, 1, 1], [], []>} : vector<34x128xbf16>, vector<128x128xbf16>, vector<34x128xf32> -> vector<34x128xf32>
    %c1_18 = arith.constant 1 : index
    %c0_19 = arith.constant 0 : index
    %c0_20 = arith.constant 0 : index
    %21 = vector.load %arg2[%c1_18, %c0_19, %c0_20] : memref<3x128x128xbf16, #tpu.memory_space<vmem>>, vector<1x128x128xbf16>
    %22 = vector.shape_cast %21 : vector<1x128x128xbf16> to vector<128x128xbf16>
    %cst_21 = arith.constant dense<0.000000e+00> : vector<34x128xf32>
    %23 = tpu.matmul %15, %22, %cst_21 {dimension_numbers = #tpu.dot_dimension_numbers<[1], [0], [0], [1], [0, 0, 1, 1], [], []>} : vector<34x128xbf16>, vector<128x128xbf16>, vector<34x128xf32> -> vector<34x128xf32>
    %24 = arith.addf %20, %23 : vector<34x128xf32>
    %c2_22 = arith.constant 2 : index
    %c0_23 = arith.constant 0 : index
    %c0_24 = arith.constant 0 : index
    %25 = vector.load %arg2[%c2_22, %c0_23, %c0_24] : memref<3x128x128xbf16, #tpu.memory_space<vmem>>, vector<1x128x128xbf16>
    %26 = vector.shape_cast %25 : vector<1x128x128xbf16> to vector<128x128xbf16>
    %cst_25 = arith.constant dense<0.000000e+00> : vector<34x128xf32>
    %27 = tpu.matmul %17, %26, %cst_25 {dimension_numbers = #tpu.dot_dimension_numbers<[1], [0], [0], [1], [0, 0, 1, 1], [], []>} : vector<34x128xbf16>, vector<128x128xbf16>, vector<34x128xf32> -> vector<34x128xf32>
    %28 = arith.addf %24, %27 : vector<34x128xf32>
    %29 = vector.extract_strided_slice %28 {offsets = [0, 0], sizes = [16, 128], strides = [1, 1]} : vector<34x128xf32> to vector<16x128xf32>
    %cst_26 = arith.constant dense<0.000000e+00> : vector<128xf32>
    %30 = vector.multi_reduction <add>, %29, %cst_26 [0] : vector<16x128xf32> to vector<128xf32>
    %31 = vector.shape_cast %30 : vector<128xf32> to vector<1x128xf32>
    %32 = arith.mulf %29, %29 : vector<16x128xf32>
    %cst_27 = arith.constant dense<0.000000e+00> : vector<128xf32>
    %33 = vector.multi_reduction <add>, %32, %cst_27 [0] : vector<16x128xf32> to vector<128xf32>
    %34 = vector.shape_cast %33 : vector<128xf32> to vector<1x128xf32>
    %35 = tpu.concatenate %31, %34 in 0 : vector<1x128xf32>, vector<1x128xf32> -> vector<2x128xf32>
    %c8_i32 = arith.constant 8 : i32
    %36 = tpu.dynamic_rotate %35 by %c8_i32 dim 1 : vector<2x128xf32>, i32 -> vector<2x128xf32>
    %37 = arith.addf %35, %36 : vector<2x128xf32>
    %c16_i32 = arith.constant 16 : i32
    %38 = tpu.dynamic_rotate %37 by %c16_i32 dim 1 : vector<2x128xf32>, i32 -> vector<2x128xf32>
    %39 = arith.addf %37, %38 : vector<2x128xf32>
    %c32_i32 = arith.constant 32 : i32
    %40 = tpu.dynamic_rotate %39 by %c32_i32 dim 1 : vector<2x128xf32>, i32 -> vector<2x128xf32>
    %41 = arith.addf %39, %40 : vector<2x128xf32>
    %c64_i32 = arith.constant 64 : i32
    %42 = tpu.dynamic_rotate %41 by %c64_i32 dim 1 : vector<2x128xf32>, i32 -> vector<2x128xf32>
    %43 = arith.addf %41, %42 : vector<2x128xf32>
    %cst_28 = arith.constant 3.906250e-03 : f32
    %44 = vector.broadcast %cst_28 : f32 to vector<2x128xf32>
    %45 = arith.mulf %43, %44 : vector<2x128xf32>
    %46 = vector.extract_strided_slice %45 {offsets = [0, 0], sizes = [1, 128], strides = [1, 1]} : vector<2x128xf32> to vector<1x128xf32>
    %47 = vector.extract_strided_slice %45 {offsets = [1, 0], sizes = [1, 128], strides = [1, 1]} : vector<2x128xf32> to vector<1x128xf32>
    %48 = arith.mulf %46, %46 : vector<1x128xf32>
    %49 = arith.subf %47, %48 : vector<1x128xf32>
    %50 = vector.broadcast %46 : vector<1x128xf32> to vector<16x128xf32>
    %51 = arith.subf %29, %50 : vector<16x128xf32>
    %cst_29 = arith.constant 9.99999974E-6 : f32
    %52 = vector.broadcast %cst_29 : f32 to vector<1x128xf32>
    %53 = arith.addf %49, %52 : vector<1x128xf32>
    %54 = math.rsqrt %53 : vector<1x128xf32>
    %55 = vector.broadcast %54 : vector<1x128xf32> to vector<16x128xf32>
    %56 = arith.mulf %51, %55 : vector<16x128xf32>
    %cst_30 = arith.constant 0.000000e+00 : f32
    %57 = vector.broadcast %cst_30 : f32 to vector<16x128xf32>
    %58 = arith.maximumf %56, %57 : vector<16x128xf32>
    %59 = vector.extract_strided_slice %28 {offsets = [18, 0], sizes = [16, 128], strides = [1, 1]} : vector<34x128xf32> to vector<16x128xf32>
    %cst_31 = arith.constant dense<0.000000e+00> : vector<128xf32>
    %60 = vector.multi_reduction <add>, %59, %cst_31 [0] : vector<16x128xf32> to vector<128xf32>
    %61 = vector.shape_cast %60 : vector<128xf32> to vector<1x128xf32>
    %62 = arith.mulf %59, %59 : vector<16x128xf32>
    %cst_32 = arith.constant dense<0.000000e+00> : vector<128xf32>
    %63 = vector.multi_reduction <add>, %62, %cst_32 [0] : vector<16x128xf32> to vector<128xf32>
    %64 = vector.shape_cast %63 : vector<128xf32> to vector<1x128xf32>
    %65 = tpu.concatenate %61, %64 in 0 : vector<1x128xf32>, vector<1x128xf32> -> vector<2x128xf32>
    %c8_i32_33 = arith.constant 8 : i32
    %66 = tpu.dynamic_rotate %65 by %c8_i32_33 dim 1 : vector<2x128xf32>, i32 -> vector<2x128xf32>
    %67 = arith.addf %65, %66 : vector<2x128xf32>
    %c16_i32_34 = arith.constant 16 : i32
    %68 = tpu.dynamic_rotate %67 by %c16_i32_34 dim 1 : vector<2x128xf32>, i32 -> vector<2x128xf32>
    %69 = arith.addf %67, %68 : vector<2x128xf32>
    %c32_i32_35 = arith.constant 32 : i32
    %70 = tpu.dynamic_rotate %69 by %c32_i32_35 dim 1 : vector<2x128xf32>, i32 -> vector<2x128xf32>
    %71 = arith.addf %69, %70 : vector<2x128xf32>
    %c64_i32_36 = arith.constant 64 : i32
    %72 = tpu.dynamic_rotate %71 by %c64_i32_36 dim 1 : vector<2x128xf32>, i32 -> vector<2x128xf32>
    %73 = arith.addf %71, %72 : vector<2x128xf32>
    %cst_37 = arith.constant 3.906250e-03 : f32
    %74 = vector.broadcast %cst_37 : f32 to vector<2x128xf32>
    %75 = arith.mulf %73, %74 : vector<2x128xf32>
    %76 = vector.extract_strided_slice %75 {offsets = [0, 0], sizes = [1, 128], strides = [1, 1]} : vector<2x128xf32> to vector<1x128xf32>
    %77 = vector.extract_strided_slice %75 {offsets = [1, 0], sizes = [1, 128], strides = [1, 1]} : vector<2x128xf32> to vector<1x128xf32>
    %78 = arith.mulf %76, %76 : vector<1x128xf32>
    %79 = arith.subf %77, %78 : vector<1x128xf32>
    %80 = vector.broadcast %76 : vector<1x128xf32> to vector<16x128xf32>
    %81 = arith.subf %59, %80 : vector<16x128xf32>
    %cst_38 = arith.constant 9.99999974E-6 : f32
    %82 = vector.broadcast %cst_38 : f32 to vector<1x128xf32>
    %83 = arith.addf %79, %82 : vector<1x128xf32>
    %84 = math.rsqrt %83 : vector<1x128xf32>
    %85 = vector.broadcast %84 : vector<1x128xf32> to vector<16x128xf32>
    %86 = arith.mulf %81, %85 : vector<16x128xf32>
    %cst_39 = arith.constant 0.000000e+00 : f32
    %87 = vector.broadcast %cst_39 : f32 to vector<16x128xf32>
    %88 = arith.maximumf %86, %87 : vector<16x128xf32>
    %c0_40 = arith.constant 0 : index
    %c0_41 = arith.constant 0 : index
    %89 = vector.load %arg5[%c0_40, %c0_41] : memref<36x128xf32, #tpu.memory_space<vmem>>, vector<1x128xf32>
    tpu.vector_store %arg5[%c0_40, %c0_41], %1 {strides = array<i32>} : memref<36x128xf32, #tpu.memory_space<vmem>>, vector<1x128xf32>,
    %c1_42 = arith.constant 1 : index
    %c0_43 = arith.constant 0 : index
    %90 = vector.load %arg5[%c1_42, %c0_43] : memref<36x128xf32, #tpu.memory_space<vmem>>, vector<16x128xf32>
    tpu.vector_store %arg5[%c1_42, %c0_43], %58 {strides = array<i32>} : memref<36x128xf32, #tpu.memory_space<vmem>>, vector<16x128xf32>,
    %c17_44 = arith.constant 17 : index
    %c0_45 = arith.constant 0 : index
    %91 = vector.load %arg5[%c17_44, %c0_45] : memref<36x128xf32, #tpu.memory_space<vmem>>, vector<1x128xf32>
    tpu.vector_store %arg5[%c17_44, %c0_45], %1 {strides = array<i32>} : memref<36x128xf32, #tpu.memory_space<vmem>>, vector<1x128xf32>,
    %c18_46 = arith.constant 18 : index
    %c0_47 = arith.constant 0 : index
    %92 = vector.load %arg5[%c18_46, %c0_47] : memref<36x128xf32, #tpu.memory_space<vmem>>, vector<1x128xf32>
    tpu.vector_store %arg5[%c18_46, %c0_47], %1 {strides = array<i32>} : memref<36x128xf32, #tpu.memory_space<vmem>>, vector<1x128xf32>,
    %c19_48 = arith.constant 19 : index
    %c0_49 = arith.constant 0 : index
    %93 = vector.load %arg5[%c19_48, %c0_49] : memref<36x128xf32, #tpu.memory_space<vmem>>, vector<16x128xf32>
    tpu.vector_store %arg5[%c19_48, %c0_49], %88 {strides = array<i32>} : memref<36x128xf32, #tpu.memory_space<vmem>>, vector<16x128xf32>,
    %c35_50 = arith.constant 35 : index
    %c0_51 = arith.constant 0 : index
    %94 = vector.load %arg5[%c35_50, %c0_51] : memref<36x128xf32, #tpu.memory_space<vmem>>, vector<1x128xf32>
    tpu.vector_store %arg5[%c35_50, %c0_51], %1 {strides = array<i32>} : memref<36x128xf32, #tpu.memory_space<vmem>>, vector<1x128xf32>,
    %c0_52 = arith.constant 0 : index
    %c0_53 = arith.constant 0 : index
    %95 = vector.load %arg5[%c0_52, %c0_53] : memref<36x128xf32, #tpu.memory_space<vmem>>, vector<34x128xf32>
    %96 = arith.truncf %95 : vector<34x128xf32> to vector<34x128xbf16>
    %c1_54 = arith.constant 1 : index
    %c0_55 = arith.constant 0 : index
    %97 = vector.load %arg5[%c1_54, %c0_55] : memref<36x128xf32, #tpu.memory_space<vmem>>, vector<34x128xf32>
    %98 = arith.truncf %97 : vector<34x128xf32> to vector<34x128xbf16>
    %c2_56 = arith.constant 2 : index
    %c0_57 = arith.constant 0 : index
    %99 = vector.load %arg5[%c2_56, %c0_57] : memref<36x128xf32, #tpu.memory_space<vmem>>, vector<34x128xf32>
    %100 = arith.truncf %99 : vector<34x128xf32> to vector<34x128xbf16>
    %c0_58 = arith.constant 0 : index
    %c0_59 = arith.constant 0 : index
    %c0_60 = arith.constant 0 : index
    %101 = vector.load %arg3[%c0_58, %c0_59, %c0_60] : memref<3x128x128xbf16, #tpu.memory_space<vmem>>, vector<1x128x128xbf16>
    %102 = vector.shape_cast %101 : vector<1x128x128xbf16> to vector<128x128xbf16>
    %cst_61 = arith.constant dense<0.000000e+00> : vector<34x128xf32>
    %103 = tpu.matmul %96, %102, %cst_61 {dimension_numbers = #tpu.dot_dimension_numbers<[1], [0], [0], [1], [0, 0, 1, 1], [], []>} : vector<34x128xbf16>, vector<128x128xbf16>, vector<34x128xf32> -> vector<34x128xf32>
    %c1_62 = arith.constant 1 : index
    %c0_63 = arith.constant 0 : index
    %c0_64 = arith.constant 0 : index
    %104 = vector.load %arg3[%c1_62, %c0_63, %c0_64] : memref<3x128x128xbf16, #tpu.memory_space<vmem>>, vector<1x128x128xbf16>
    %105 = vector.shape_cast %104 : vector<1x128x128xbf16> to vector<128x128xbf16>
    %cst_65 = arith.constant dense<0.000000e+00> : vector<34x128xf32>
    %106 = tpu.matmul %98, %105, %cst_65 {dimension_numbers = #tpu.dot_dimension_numbers<[1], [0], [0], [1], [0, 0, 1, 1], [], []>} : vector<34x128xbf16>, vector<128x128xbf16>, vector<34x128xf32> -> vector<34x128xf32>
    %107 = arith.addf %103, %106 : vector<34x128xf32>
    %c2_66 = arith.constant 2 : index
    %c0_67 = arith.constant 0 : index
    %c0_68 = arith.constant 0 : index
    %108 = vector.load %arg3[%c2_66, %c0_67, %c0_68] : memref<3x128x128xbf16, #tpu.memory_space<vmem>>, vector<1x128x128xbf16>
    %109 = vector.shape_cast %108 : vector<1x128x128xbf16> to vector<128x128xbf16>
    %cst_69 = arith.constant dense<0.000000e+00> : vector<34x128xf32>
    %110 = tpu.matmul %100, %109, %cst_69 {dimension_numbers = #tpu.dot_dimension_numbers<[1], [0], [0], [1], [0, 0, 1, 1], [], []>} : vector<34x128xbf16>, vector<128x128xbf16>, vector<34x128xf32> -> vector<34x128xf32>
    %111 = arith.addf %107, %110 : vector<34x128xf32>
    %112 = vector.extract_strided_slice %0 {offsets = [0, 0, 0], sizes = [1, 16, 128], strides = [1, 1, 1]} : vector<2x16x128xf32> to vector<1x16x128xf32>
    %113 = vector.shape_cast %112 : vector<1x16x128xf32> to vector<16x128xf32>
    %114 = vector.extract_strided_slice %111 {offsets = [0, 0], sizes = [16, 128], strides = [1, 1]} : vector<34x128xf32> to vector<16x128xf32>
    %cst_70 = arith.constant dense<0.000000e+00> : vector<128xf32>
    %115 = vector.multi_reduction <add>, %114, %cst_70 [0] : vector<16x128xf32> to vector<128xf32>
    %116 = vector.shape_cast %115 : vector<128xf32> to vector<1x128xf32>
    %117 = arith.mulf %114, %114 : vector<16x128xf32>
    %cst_71 = arith.constant dense<0.000000e+00> : vector<128xf32>
    %118 = vector.multi_reduction <add>, %117, %cst_71 [0] : vector<16x128xf32> to vector<128xf32>
    %119 = vector.shape_cast %118 : vector<128xf32> to vector<1x128xf32>
    %120 = tpu.concatenate %116, %119 in 0 : vector<1x128xf32>, vector<1x128xf32> -> vector<2x128xf32>
    %c8_i32_72 = arith.constant 8 : i32
    %121 = tpu.dynamic_rotate %120 by %c8_i32_72 dim 1 : vector<2x128xf32>, i32 -> vector<2x128xf32>
    %122 = arith.addf %120, %121 : vector<2x128xf32>
    %c16_i32_73 = arith.constant 16 : i32
    %123 = tpu.dynamic_rotate %122 by %c16_i32_73 dim 1 : vector<2x128xf32>, i32 -> vector<2x128xf32>
    %124 = arith.addf %122, %123 : vector<2x128xf32>
    %c32_i32_74 = arith.constant 32 : i32
    %125 = tpu.dynamic_rotate %124 by %c32_i32_74 dim 1 : vector<2x128xf32>, i32 -> vector<2x128xf32>
    %126 = arith.addf %124, %125 : vector<2x128xf32>
    %c64_i32_75 = arith.constant 64 : i32
    %127 = tpu.dynamic_rotate %126 by %c64_i32_75 dim 1 : vector<2x128xf32>, i32 -> vector<2x128xf32>
    %128 = arith.addf %126, %127 : vector<2x128xf32>
    %cst_76 = arith.constant 3.906250e-03 : f32
    %129 = vector.broadcast %cst_76 : f32 to vector<2x128xf32>
    %130 = arith.mulf %128, %129 : vector<2x128xf32>
    %131 = vector.extract_strided_slice %130 {offsets = [0, 0], sizes = [1, 128], strides = [1, 1]} : vector<2x128xf32> to vector<1x128xf32>
    %132 = vector.extract_strided_slice %130 {offsets = [1, 0], sizes = [1, 128], strides = [1, 1]} : vector<2x128xf32> to vector<1x128xf32>
    %133 = arith.mulf %131, %131 : vector<1x128xf32>
    %134 = arith.subf %132, %133 : vector<1x128xf32>
    %135 = vector.broadcast %131 : vector<1x128xf32> to vector<16x128xf32>
    %136 = arith.subf %114, %135 : vector<16x128xf32>
    %cst_77 = arith.constant 9.99999974E-6 : f32
    %137 = vector.broadcast %cst_77 : f32 to vector<1x128xf32>
    %138 = arith.addf %134, %137 : vector<1x128xf32>
    %139 = math.rsqrt %138 : vector<1x128xf32>
    %140 = vector.broadcast %139 : vector<1x128xf32> to vector<16x128xf32>
    %141 = arith.mulf %136, %140 : vector<16x128xf32>
    %142 = arith.addf %113, %141 : vector<16x128xf32>
    %c0_78 = arith.constant 0 : index
    %c0_79 = arith.constant 0 : index
    %c0_80 = arith.constant 0 : index
    %143 = vector.load %arg4[%c0_78, %c0_79, %c0_80] : memref<2x16x128xf32, #tpu.memory_space<vmem>>, vector<1x16x128xf32>
    %144 = vector.shape_cast %143 : vector<1x16x128xf32> to vector<16x128xf32>
    %145 = vector.shape_cast %142 : vector<16x128xf32> to vector<1x16x128xf32>
    tpu.vector_store %arg4[%c0_78, %c0_79, %c0_80], %145 {strides = array<i32>} : memref<2x16x128xf32, #tpu.memory_space<vmem>>, vector<1x16x128xf32>,
    %146 = vector.extract_strided_slice %0 {offsets = [1, 0, 0], sizes = [1, 16, 128], strides = [1, 1, 1]} : vector<2x16x128xf32> to vector<1x16x128xf32>
    %147 = vector.shape_cast %146 : vector<1x16x128xf32> to vector<16x128xf32>
    %148 = vector.extract_strided_slice %111 {offsets = [18, 0], sizes = [16, 128], strides = [1, 1]} : vector<34x128xf32> to vector<16x128xf32>
    %cst_81 = arith.constant dense<0.000000e+00> : vector<128xf32>
    %149 = vector.multi_reduction <add>, %148, %cst_81 [0] : vector<16x128xf32> to vector<128xf32>
    %150 = vector.shape_cast %149 : vector<128xf32> to vector<1x128xf32>
    %151 = arith.mulf %148, %148 : vector<16x128xf32>
    %cst_82 = arith.constant dense<0.000000e+00> : vector<128xf32>
    %152 = vector.multi_reduction <add>, %151, %cst_82 [0] : vector<16x128xf32> to vector<128xf32>
    %153 = vector.shape_cast %152 : vector<128xf32> to vector<1x128xf32>
    %154 = tpu.concatenate %150, %153 in 0 : vector<1x128xf32>, vector<1x128xf32> -> vector<2x128xf32>
    %c8_i32_83 = arith.constant 8 : i32
    %155 = tpu.dynamic_rotate %154 by %c8_i32_83 dim 1 : vector<2x128xf32>, i32 -> vector<2x128xf32>
    %156 = arith.addf %154, %155 : vector<2x128xf32>
    %c16_i32_84 = arith.constant 16 : i32
    %157 = tpu.dynamic_rotate %156 by %c16_i32_84 dim 1 : vector<2x128xf32>, i32 -> vector<2x128xf32>
    %158 = arith.addf %156, %157 : vector<2x128xf32>
    %c32_i32_85 = arith.constant 32 : i32
    %159 = tpu.dynamic_rotate %158 by %c32_i32_85 dim 1 : vector<2x128xf32>, i32 -> vector<2x128xf32>
    %160 = arith.addf %158, %159 : vector<2x128xf32>
    %c64_i32_86 = arith.constant 64 : i32
    %161 = tpu.dynamic_rotate %160 by %c64_i32_86 dim 1 : vector<2x128xf32>, i32 -> vector<2x128xf32>
    %162 = arith.addf %160, %161 : vector<2x128xf32>
    %cst_87 = arith.constant 3.906250e-03 : f32
    %163 = vector.broadcast %cst_87 : f32 to vector<2x128xf32>
    %164 = arith.mulf %162, %163 : vector<2x128xf32>
    %165 = vector.extract_strided_slice %164 {offsets = [0, 0], sizes = [1, 128], strides = [1, 1]} : vector<2x128xf32> to vector<1x128xf32>
    %166 = vector.extract_strided_slice %164 {offsets = [1, 0], sizes = [1, 128], strides = [1, 1]} : vector<2x128xf32> to vector<1x128xf32>
    %167 = arith.mulf %165, %165 : vector<1x128xf32>
    %168 = arith.subf %166, %167 : vector<1x128xf32>
    %169 = vector.broadcast %165 : vector<1x128xf32> to vector<16x128xf32>
    %170 = arith.subf %148, %169 : vector<16x128xf32>
    %cst_88 = arith.constant 9.99999974E-6 : f32
    %171 = vector.broadcast %cst_88 : f32 to vector<1x128xf32>
    %172 = arith.addf %168, %171 : vector<1x128xf32>
    %173 = math.rsqrt %172 : vector<1x128xf32>
    %174 = vector.broadcast %173 : vector<1x128xf32> to vector<16x128xf32>
    %175 = arith.mulf %170, %174 : vector<16x128xf32>
    %176 = arith.addf %147, %175 : vector<16x128xf32>
    %c1_89 = arith.constant 1 : index
    %c0_90 = arith.constant 0 : index
    %c0_91 = arith.constant 0 : index
    %177 = vector.load %arg4[%c1_89, %c0_90, %c0_91] : memref<2x16x128xf32, #tpu.memory_space<vmem>>, vector<1x16x128xf32>
    %178 = vector.shape_cast %177 : vector<1x16x128xf32> to vector<16x128xf32>
    %179 = vector.shape_cast %176 : vector<16x128xf32> to vector<1x16x128xf32>
    tpu.vector_store %arg4[%c1_89, %c0_90, %c0_91], %179 {strides = array<i32>} : memref<2x16x128xf32, #tpu.memory_space<vmem>>, vector<1x16x128xf32>,
    return
  }
  func.func @transform_0(%arg0: i32) -> (i32, i32, i32) {
    %c0_i32 = arith.constant 0 : i32
    %c0_i32_0 = arith.constant 0 : i32
    %c0_i32_1 = arith.constant 0 : i32
    return %arg0, %c0_i32, %c0_i32_0 : i32, i32, i32
  }
  func.func @transform_1(%arg0: i32) -> (i32, i32, i32) {
    %c0_i32 = arith.constant 0 : i32
    %c0_i32_0 = arith.constant 0 : i32
    %c0_i32_1 = arith.constant 0 : i32
    %c0_i32_2 = arith.constant 0 : i32
    return %c0_i32, %c0_i32_0, %c0_i32_1 : i32, i32, i32
  }
  func.func @transform_2(%arg0: i32) -> (i32, i32, i32) {
    %c0_i32 = arith.constant 0 : i32
    %c0_i32_0 = arith.constant 0 : i32
    %c0_i32_1 = arith.constant 0 : i32
    %c0_i32_2 = arith.constant 0 : i32
    return %c0_i32, %c0_i32_0, %c0_i32_1 : i32, i32, i32
  }
  func.func @transform_3(%arg0: i32) -> (i32, i32, i32) {
    %c0_i32 = arith.constant 0 : i32
    %c0_i32_0 = arith.constant 0 : i32
    %c0_i32_1 = arith.constant 0 : i32
    return %arg0, %c0_i32, %c0_i32_0 : i32, i32, i32
  }
}

</mosaic_0001>

<llo_original>
// kernel: tpu_custom_call.1
$region0: #{tpu_custom_call.1}
  #allocation0 [shape = 'u32[]', space=smem, size = 0x4, offset = 0x4, fixed_abs, tag = 'smem constant byte address 0x4 - core index']
  #allocation1 [shape = 'u32[72,128]{1,0:T(1,128)}', space=vmem, size = 0x9000, scoped, tag = 'internal scratch']
  #allocation2 [shape = 'f32[36,128]{1,0:T(8,128)}', space=vmem, size = 0x5000, scoped, tag = 'scratch operand']
  %s0 = inlined_call_operand.hbm [shape: f32[2,16,128], index: 0, kind: input, shape index: {}]
  %s1 = inlined_call_operand.hbm [shape: bf16[3,128,128], index: 1, kind: input, shape index: {}]
  %s2 = inlined_call_operand.hbm [shape: bf16[3,128,128], index: 2, kind: input, shape index: {}]
  %s3 = inlined_call_operand.hbm [shape: f32[2,16,128], index: 3, kind: output, shape index: {}]
  %s4 = sld [smem:[#allocation0]]
  $region34: #{tpu_custom_call.1} parent=0
    _
  %s6 = ssub.s32 1, %s4
  %s7 = scalar_select 0, %s6, %s4
  $region1: #{tpu_custom_call.1} parent=0
    #allocation3 [shape = 'u8[16384]{0}', space=vmem, size = 0x4000, scoped, tag = 'input window, operand 0, single buffered']
    #allocation4 [shape = 's32[1]{0}', space=sflag, size = 0x4, scoped, tag = 'scoped memory for tpu_custom_call.1']
    #allocation5 [shape = 's32[1]{0}', space=sflag, size = 0x4, scoped, tag = 'scoped memory for tpu_custom_call.1']
    #allocation6 [shape = 'u8[98304]{0}', space=vmem, size = 0x18000, scoped, tag = 'input window, operand 1, single buffered']
    #allocation7 [shape = 's32[1]{0}', space=sflag, size = 0x4, scoped, tag = 'scoped memory for tpu_custom_call.1']
    #allocation8 [shape = 'u8[98304]{0}', space=vmem, size = 0x18000, scoped, tag = 'input window, operand 2, single buffered']
    #allocation9 [shape = 'u8[16384]{0}', space=vmem, size = 0x4000, scoped, tag = 'output window, operand 0, single buffered']
    %8 = vsyncpa [#allocation4], 0
    %9 = vsyncpa [#allocation7], 0
    %10 = vsyncpa [#allocation5], 0
    // Predicated region
    $region2: #{tpu_custom_call.1} parent=1 // pred_check
      _
    $region3: #{tpu_custom_call.1} parent=1 // pred_check_branch
      %12 = sbr.rel (0) target = $region5
    $region4: #{tpu_custom_call.1} parent=1 // pred_region
      %14 = vsyncadd [#allocation4], 0
      %s15 = sshll.u32 %s0, 4
      %s16 = int_to_ptr.hbm [resolvable:$true] %s15
      %s17 = sshll.u32 [#allocation3], 4
      %s18 = int_to_ptr.vmem [resolvable:$true] %s17
      %23 = dma.hbm_to_vmem [thread:$0]  %s16, 512, %s18, [#allocation4], 128, 128, 8
    $region5: #{tpu_custom_call.1} parent=1 // pred_fallthru
      _
    // Predicated region
    $region6: #{tpu_custom_call.1} parent=1 // pred_check
      _
    $region7: #{tpu_custom_call.1} parent=1 // pred_check_branch
      %25 = sbr.rel (0) target = $region9
    $region8: #{tpu_custom_call.1} parent=1 // pred_region
      %27 = vsyncadd [#allocation7], 0
      %s28 = sshll.u32 %s1, 4
      %s29 = int_to_ptr.hbm [resolvable:$true] %s28
      %s30 = sshll.u32 [#allocation6], 4
      %s31 = int_to_ptr.vmem [resolvable:$true] %s30
      %36 = dma.hbm_to_vmem [thread:$0]  %s29, 3072, %s31, [#allocation7], 64, 64, 4
    $region9: #{tpu_custom_call.1} parent=1 // pred_fallthru
      _
    // Predicated region
    $region10: #{tpu_custom_call.1} parent=1 // pred_check
      _
    $region11: #{tpu_custom_call.1} parent=1 // pred_check_branch
      %38 = sbr.rel (0) target = $region13
    $region12: #{tpu_custom_call.1} parent=1 // pred_region
      %40 = vsyncadd [#allocation7], 0
      %s41 = sshll.u32 %s2, 4
      %s42 = int_to_ptr.hbm [resolvable:$true] %s41
      %s43 = sshll.u32 [#allocation8], 4
      %s44 = int_to_ptr.vmem [resolvable:$true] %s43
      %49 = dma.hbm_to_vmem [thread:$0]  %s42, 3072, %s44, [#allocation7], 64, 64, 4
    $region13: #{tpu_custom_call.1} parent=1 // pred_fallthru
      _
    // Predicated region
    $region14: #{tpu_custom_call.1} parent=1 // pred_check
      _
    $region15: #{tpu_custom_call.1} parent=1 // pred_check_branch
      %51 = sbr.rel (0) target = $region17
    $region16: #{tpu_custom_call.1} parent=1 // pred_region
      %53 = dma.done [#allocation4], 512
    $region17: #{tpu_custom_call.1} parent=1 // pred_fallthru
      _
    // Predicated region
    $region18: #{tpu_custom_call.1} parent=1 // pred_check
      _
    $region19: #{tpu_custom_call.1} parent=1 // pred_check_branch
      %55 = sbr.rel (0) target = $region21
    $region20: #{tpu_custom_call.1} parent=1 // pred_region
      %57 = dma.done [#allocation7], 3072
    $region21: #{tpu_custom_call.1} parent=1 // pred_fallthru
      _
    // Predicated region
    $region22: #{tpu_custom_call.1} parent=1 // pred_check
      _
    $region23: #{tpu_custom_call.1} parent=1 // pred_check_branch
      %59 = sbr.rel (0) target = $region25
    $region24: #{tpu_custom_call.1} parent=1 // pred_region
      %61 = dma.done [#allocation7], 3072
    $region25: #{tpu_custom_call.1} parent=1 // pred_fallthru
      _
    %v62 = vld [vmem:[#allocation3] sm:$0xff]
    %v63 = vld [vmem:[#allocation3 + $0x8] sm:$0xff]
    %v64 = vld [vmem:[#allocation3 + $0x10] sm:$0xff]
    %v65 = vld [vmem:[#allocation3 + $0x18] sm:$0xff]
    %66 = vst [vmem:[#allocation2] sm:$0x1] 0.0
    %67 = vst [vmem:[#allocation2 + $0x1] sm:$0xff] %v62
    %68 = vst [vmem:[#allocation2 + $0x9] sm:$0xff] %v63
    %69 = vst [vmem:[#allocation2 + $0x11] sm:$0x1] 0.0
    %70 = vst [vmem:[#allocation2 + $0x12] sm:$0x1] 0.0
    %71 = vst [vmem:[#allocation2 + $0x13] sm:$0xff] %v64
    %72 = vst [vmem:[#allocation2 + $0x1b] sm:$0xff] %v65
    %73 = vst [vmem:[#allocation2 + $0x23] sm:$0x1] 0.0
    %v74 = vld [vmem:[#allocation2] sm:$0xff]
    %v75 = vld [vmem:[#allocation2 + $0x8] sm:$0xff]
    %v76 = vld [vmem:[#allocation2 + $0x10] sm:$0xff]
    %v77 = vld [vmem:[#allocation2 + $0x18] sm:$0xff]
    %v78 = vld [vmem:[#allocation2 + $0x20] sm:$0x3]
    %v79 = vpack.c.bf16 %v75, %v74
    %v80 = vpack.c.bf16 %v77, %v76
    %v81 = vpack.c.bf16 %v78, %v78
    %v82 = vld [vmem:[#allocation2 + $0x1] sm:$0xff]
    %v83 = vld [vmem:[#allocation2 + $0x9] sm:$0xff]
    %v84 = vld [vmem:[#allocation2 + $0x11] sm:$0xff]
    %v85 = vld [vmem:[#allocation2 + $0x19] sm:$0xff]
    %v86 = vld [vmem:[#allocation2 + $0x21] sm:$0x3]
    %v87 = vpack.c.bf16 %v83, %v82
    %v88 = vpack.c.bf16 %v85, %v84
    %v89 = vpack.c.bf16 %v86, %v86
    %v90 = vld [vmem:[#allocation2 + $0x2] sm:$0xff]
    %v91 = vld [vmem:[#allocation2 + $0xa] sm:$0xff]
    %v92 = vld [vmem:[#allocation2 + $0x12] sm:$0xff]
    %v93 = vld [vmem:[#allocation2 + $0x1a] sm:$0xff]
    %v94 = vld [vmem:[#allocation2 + $0x22] sm:$0x3]
    %v95 = vpack.c.bf16 %v91, %v90
    %v96 = vpack.c.bf16 %v93, %v92
    %v97 = vpack.c.bf16 %v94, %v94
    %v98 = vld [vmem:[#allocation6] sm:$0xf]
    %v99 = vld [vmem:[#allocation6 + $0x4] sm:$0xf]
    %v100 = vld [vmem:[#allocation6 + $0x8] sm:$0xf]
    %v101 = vld [vmem:[#allocation6 + $0xc] sm:$0xf]
    %v102 = vld [vmem:[#allocation6 + $0x10] sm:$0xf]
    %v103 = vld [vmem:[#allocation6 + $0x14] sm:$0xf]
    %v104 = vld [vmem:[#allocation6 + $0x18] sm:$0xf]
    %v105 = vld [vmem:[#allocation6 + $0x1c] sm:$0xf]
    %v106 = vld [vmem:[#allocation6 + $0x20] sm:$0xf]
    %v107 = vld [vmem:[#allocation6 + $0x24] sm:$0xf]
    %v108 = vld [vmem:[#allocation6 + $0x28] sm:$0xf]
    %v109 = vld [vmem:[#allocation6 + $0x2c] sm:$0xf]
    %v110 = vld [vmem:[#allocation6 + $0x30] sm:$0xf]
    %v111 = vld [vmem:[#allocation6 + $0x34] sm:$0xf]
    %v112 = vld [vmem:[#allocation6 + $0x38] sm:$0xf]
    %v113 = vld [vmem:[#allocation6 + $0x3c] sm:$0xf]
    %s114 = scalar_lea.vmem [#allocation6], 64
    %v115 = vld [vmem:[%s114] sm:$0xf]
    %v116 = vld [vmem:[%s114 + $0x4] sm:$0xf]
    %v117 = vld [vmem:[%s114 + $0x8] sm:$0xf]
    %v118 = vld [vmem:[%s114 + $0xc] sm:$0xf]
    %v119 = vld [vmem:[%s114 + $0x10] sm:$0xf]
    %v120 = vld [vmem:[%s114 + $0x14] sm:$0xf]
    %v121 = vld [vmem:[%s114 + $0x18] sm:$0xf]
    %v122 = vld [vmem:[%s114 + $0x1c] sm:$0xf]
    %v123 = vld [vmem:[%s114 + $0x20] sm:$0xf]
    %v124 = vld [vmem:[%s114 + $0x24] sm:$0xf]
    %v125 = vld [vmem:[%s114 + $0x28] sm:$0xf]
    %v126 = vld [vmem:[%s114 + $0x2c] sm:$0xf]
    %v127 = vld [vmem:[%s114 + $0x30] sm:$0xf]
    %v128 = vld [vmem:[%s114 + $0x34] sm:$0xf]
    %v129 = vld [vmem:[%s114 + $0x38] sm:$0xf]
    %v130 = vld [vmem:[%s114 + $0x3c] sm:$0xf]
    %v147 = vunpack.c.l.b16 %v115
    %v148 = vunpack.c.l.b16 %v116
    %v149 = vunpack.c.l.b16 %v117
    %v150 = vunpack.c.l.b16 %v118
    %v151 = vunpack.c.l.b16 %v119
    %v152 = vunpack.c.l.b16 %v120
    %v153 = vunpack.c.l.b16 %v121
    %v154 = vunpack.c.l.b16 %v122
    %v155 = vunpack.c.l.b16 %v123
    %v156 = vunpack.c.l.b16 %v124
    %v157 = vunpack.c.l.b16 %v125
    %v158 = vunpack.c.l.b16 %v126
    %v159 = vunpack.c.l.b16 %v127
    %v160 = vunpack.c.l.b16 %v128
    %v161 = vunpack.c.l.b16 %v129
    %v162 = vunpack.c.l.b16 %v130
    %v163 = vpack.c.b16 %v148, %v147
    %v164 = vpack.c.b16 %v150, %v149
    %v165 = vpack.c.b16 %v152, %v151
    %v166 = vpack.c.b16 %v154, %v153
    %v167 = vpack.c.b16 %v156, %v155
    %v168 = vpack.c.b16 %v158, %v157
    %v169 = vpack.c.b16 %v160, %v159
    %v170 = vpack.c.b16 %v162, %v161
    %179 = vmatpush.bf16.msra.mxu0 %v170
    %180 = vmatpush.bf16.msra.mxu0 %v169
    %181 = vmatpush.bf16.msra.mxu0 %v168
    %182 = vmatpush.bf16.msra.mxu0 %v167
    %183 = vmatpush.bf16.msra.mxu0 %v166
    %184 = vmatpush.bf16.msra.mxu0 %v165
    %185 = vmatpush.bf16.msra.mxu0 %v164
    %186 = vmatpush.bf16.msra.mxu0 %v163
    %187 = vmatmul.bf16.gmra.mxu0 %v87
    %v188 = vpop.f32.mrf.mxu0
    %v189 = vadd.f32 0.0, %v188
    %v190 = vpop.f32.mrf.mxu0
    %v191 = vadd.f32 0.0, %v190
    %192 = vmatmul.bf16.gmra.mxu0 %v88
    %v193 = vpop.f32.mrf.mxu0
    %v194 = vadd.f32 0.0, %v193
    %v195 = vpop.f32.mrf.mxu0
    %v196 = vadd.f32 0.0, %v195
    %197 = vmatmul.bf16.gmra.mxu0 %v89
    %v198 = vpop.f32.mrf.mxu0
    %v199 = vadd.f32 0.0, %v198
    %v200 = vpop.f32.mrf.mxu0
    %201 = vdwg.mxu0
    %v218 = vunpack.c.l.b16 %v98
    %v219 = vunpack.c.l.b16 %v99
    %v220 = vunpack.c.l.b16 %v100
    %v221 = vunpack.c.l.b16 %v101
    %v222 = vunpack.c.l.b16 %v102
    %v223 = vunpack.c.l.b16 %v103
    %v224 = vunpack.c.l.b16 %v104
    %v225 = vunpack.c.l.b16 %v105
    %v226 = vunpack.c.l.b16 %v106
    %v227 = vunpack.c.l.b16 %v107
    %v228 = vunpack.c.l.b16 %v108
    %v229 = vunpack.c.l.b16 %v109
    %v230 = vunpack.c.l.b16 %v110
    %v231 = vunpack.c.l.b16 %v111
    %v232 = vunpack.c.l.b16 %v112
    %v233 = vunpack.c.l.b16 %v113
    %v234 = vpack.c.b16 %v219, %v218
    %v235 = vpack.c.b16 %v221, %v220
    %v236 = vpack.c.b16 %v223, %v222
    %v237 = vpack.c.b16 %v225, %v224
    %v238 = vpack.c.b16 %v227, %v226
    %v239 = vpack.c.b16 %v229, %v228
    %v240 = vpack.c.b16 %v231, %v230
    %v241 = vpack.c.b16 %v233, %v232
    %250 = vmatpush.bf16.msra.mxu0 %v241
    %251 = vmatpush.bf16.msra.mxu0 %v240
    %252 = vmatpush.bf16.msra.mxu0 %v239
    %253 = vmatpush.bf16.msra.mxu0 %v238
    %254 = vmatpush.bf16.msra.mxu0 %v237
    %255 = vmatpush.bf16.msra.mxu0 %v236
    %256 = vmatpush.bf16.msra.mxu0 %v235
    %257 = vmatpush.bf16.msra.mxu0 %v234
    %258 = vmatmul.bf16.gmra.mxu0 %v79
    %v259 = vpop.f32.mrf.mxu0
    %v260 = vadd.f32 %v189, %v259
    %v261 = vpop.f32.mrf.mxu0
    %v262 = vadd.f32 %v191, %v261
    %263 = vmatmul.bf16.gmra.mxu0 %v80
    %v264 = vpop.f32.mrf.mxu0
    %v265 = vadd.f32 %v194, %v264
    %v266 = vpop.f32.mrf.mxu0
    %v267 = vadd.f32 %v196, %v266
    %268 = vmatmul.bf16.gmra.mxu0 %v81
    %v269 = vpop.f32.mrf.mxu0
    %v270 = vadd.f32 %v199, %v269
    %v271 = vpop.f32.mrf.mxu0
    %272 = vdwg.mxu0
    %s273 = scalar_lea.vmem [#allocation6], 128
    %v274 = vld [vmem:[%s273] sm:$0xf]
    %v275 = vld [vmem:[%s273 + $0x4] sm:$0xf]
    %v276 = vld [vmem:[%s273 + $0x8] sm:$0xf]
    %v277 = vld [vmem:[%s273 + $0xc] sm:$0xf]
    %v278 = vld [vmem:[%s273 + $0x10] sm:$0xf]
    %v279 = vld [vmem:[%s273 + $0x14] sm:$0xf]
    %v280 = vld [vmem:[%s273 + $0x18] sm:$0xf]
    %v281 = vld [vmem:[%s273 + $0x1c] sm:$0xf]
    %v282 = vld [vmem:[%s273 + $0x20] sm:$0xf]
    %v283 = vld [vmem:[%s273 + $0x24] sm:$0xf]
    %v284 = vld [vmem:[%s273 + $0x28] sm:$0xf]
    %v285 = vld [vmem:[%s273 + $0x2c] sm:$0xf]
    %v286 = vld [vmem:[%s273 + $0x30] sm:$0xf]
    %v287 = vld [vmem:[%s273 + $0x34] sm:$0xf]
    %v288 = vld [vmem:[%s273 + $0x38] sm:$0xf]
    %v289 = vld [vmem:[%s273 + $0x3c] sm:$0xf]
    %v306 = vunpack.c.l.b16 %v274
    %v307 = vunpack.c.l.b16 %v275
    %v308 = vunpack.c.l.b16 %v276
    %v309 = vunpack.c.l.b16 %v277
    %v310 = vunpack.c.l.b16 %v278
    %v311 = vunpack.c.l.b16 %v279
    %v312 = vunpack.c.l.b16 %v280
    %v313 = vunpack.c.l.b16 %v281
    %v314 = vunpack.c.l.b16 %v282
    %v315 = vunpack.c.l.b16 %v283
    %v316 = vunpack.c.l.b16 %v284
    %v317 = vunpack.c.l.b16 %v285
    %v318 = vunpack.c.l.b16 %v286
    %v319 = vunpack.c.l.b16 %v287
    %v320 = vunpack.c.l.b16 %v288
    %v321 = vunpack.c.l.b16 %v289
    %v322 = vpack.c.b16 %v307, %v306
    %v323 = vpack.c.b16 %v309, %v308
    %v324 = vpack.c.b16 %v311, %v310
    %v325 = vpack.c.b16 %v313, %v312
    %v326 = vpack.c.b16 %v315, %v314
    %v327 = vpack.c.b16 %v317, %v316
    %v328 = vpack.c.b16 %v319, %v318
    %v329 = vpack.c.b16 %v321, %v320
    %338 = vmatpush.bf16.msra.mxu0 %v329
    %339 = vmatpush.bf16.msra.mxu0 %v328
    %340 = vmatpush.bf16.msra.mxu0 %v327
    %341 = vmatpush.bf16.msra.mxu0 %v326
    %342 = vmatpush.bf16.msra.mxu0 %v325
    %343 = vmatpush.bf16.msra.mxu0 %v324
    %344 = vmatpush.bf16.msra.mxu0 %v323
    %345 = vmatpush.bf16.msra.mxu0 %v322
    %346 = vmatmul.bf16.gmra.mxu0 %v95
    %v347 = vpop.f32.mrf.mxu0
    %v348 = vadd.f32 0.0, %v347
    %v349 = vpop.f32.mrf.mxu0
    %v350 = vadd.f32 0.0, %v349
    %351 = vmatmul.bf16.gmra.mxu0 %v96
    %v352 = vpop.f32.mrf.mxu0
    %v353 = vadd.f32 0.0, %v352
    %v354 = vpop.f32.mrf.mxu0
    %v355 = vadd.f32 0.0, %v354
    %356 = vmatmul.bf16.gmra.mxu0 %v97
    %v357 = vpop.f32.mrf.mxu0
    %v358 = vadd.f32 0.0, %v357
    %v359 = vpop.f32.mrf.mxu0
    %360 = vdwg.mxu0
    %v361 = vadd.f32 %v260, %v348
    %v362 = vadd.f32 %v262, %v350
    %v363 = vadd.f32 %v265, %v353
    %v364 = vadd.f32 %v267, %v355
    %v365 = vadd.f32 %v270, %v358
    %v366 = vadd.f32 %v361, %v362
    %v367 = vrot.slane %v366, 4
    %v368 = vadd.f32 %v366, %v367
    %v369 = vrot.slane %v368, 2
    %v370 = vadd.f32 %v368, %v369
    %v371 = vrot.slane %v370, 1
    %v372 = vadd.f32 %v370, %v371
    %v373 = vmul.f32 %v361, %v361
    %v374 = vmul.f32 %v362, %v362
    %v375 = vadd.f32 %v373, %v374
    %v376 = vrot.slane %v375, 4
    %v377 = vadd.f32 %v375, %v376
    %v378 = vrot.slane %v377, 2
    %v379 = vadd.f32 %v377, %v378
    %v380 = vrot.slane %v379, 1
    %v381 = vadd.f32 %v379, %v380
    %vm382 = vcmask 1040384
    %v383 = vsel %vm382, %v372, %v381
    %384 = vrot.lane.b32.xlu0 %v383, 8
    %v385 = vpop.permute.xlu0 %384
    %v386 = vadd.f32 %v383, %v385
    %387 = vrot.lane.b32.xlu0 %v386, 16
    %v388 = vpop.permute.xlu0 %387
    %v389 = vadd.f32 %v386, %v388
    %390 = vrot.lane.b32.xlu0 %v389, 32
    %v391 = vpop.permute.xlu0 %390
    %v392 = vadd.f32 %v389, %v391
    %393 = vrot.lane.b32.xlu0 %v392, 64
    %v394 = vpop.permute.xlu0 %393
    %v395 = vadd.f32 %v392, %v394
    %v396 = vmul.f32 %v395, 0.00390625
    %v397 = vmul.f32 %v396, %v396
    %v399 = vrot.slane %v397, 7
    %v401 = vsub.f32 %v396, %v399
    %v402 = vperm.slane %v396, 0
    %v403 = vsub.f32 %v361, %v402
    %v404 = vsub.f32 %v362, %v402
    %v405 = vadd.f32 %v401, 1e-05
    %v406 = vrsqrt.pop %v405
    %v407 = vmul.f32 %v406, %v405
    %v408 = vmul.f32 %v407, %v406
    %v409 = vmul.f32 0.5, %v408
    %v410 = vsub.f32 1.5, %v409
    %v411 = vmul.f32 %v406, %v410
    %vm412 = vweird.f32 %v405
    %vm413 = vweird.f32 %v406
    %vm414 = vmor %vm412, %vm413
    %v415 = vsel %vm414, %v406, %v411
    %v416 = vperm.slane %v415, 1
    %v417 = vmul.f32 %v403, %v416
    %v418 = vmul.f32 %v404, %v416
    %v419 = vmax.f32 %v417, 0.0
    %v420 = vmax.f32 %v418, 0.0
    %vm424 = vcmask 1045504
    %v425 = vrot.slane %v363, 2
    %v426 = vrot.slane %v364, 2
    %v427 = vsel %vm424, %v425, %v426
    %v428 = vrot.slane %v365, 2
    %v429 = vsel %vm424, %v426, %v428
    %v432 = vadd.f32 %v427, %v429
    %v433 = vrot.slane %v432, 4
    %v434 = vadd.f32 %v432, %v433
    %v435 = vrot.slane %v434, 2
    %v436 = vadd.f32 %v434, %v435
    %v437 = vrot.slane %v436, 1
    %v438 = vadd.f32 %v436, %v437
    %v439 = vmul.f32 %v363, %v363
    %v440 = vmul.f32 %v364, %v364
    %v441 = vmul.f32 %v365, %v365
    %v445 = vrot.slane %v439, 2
    %v446 = vrot.slane %v440, 2
    %v447 = vsel %vm424, %v445, %v446
    %v448 = vrot.slane %v441, 2
    %v449 = vsel %vm424, %v446, %v448
    %v452 = vadd.f32 %v447, %v449
    %v453 = vrot.slane %v452, 4
    %v454 = vadd.f32 %v452, %v453
    %v455 = vrot.slane %v454, 2
    %v456 = vadd.f32 %v454, %v455
    %v457 = vrot.slane %v456, 1
    %v458 = vadd.f32 %v456, %v457
    %v459 = vsel %vm382, %v438, %v458
    %460 = vrot.lane.b32.xlu0 %v459, 8
    %v461 = vpop.permute.xlu0 %460
    %v462 = vadd.f32 %v459, %v461
    %463 = vrot.lane.b32.xlu0 %v462, 16
    %v464 = vpop.permute.xlu0 %463
    %v465 = vadd.f32 %v462, %v464
    %466 = vrot.lane.b32.xlu0 %v465, 32
    %v467 = vpop.permute.xlu0 %466
    %v468 = vadd.f32 %v465, %v467
    %469 = vrot.lane.b32.xlu0 %v468, 64
    %v470 = vpop.permute.xlu0 %469
    %v471 = vadd.f32 %v468, %v470
    %v472 = vmul.f32 %v471, 0.00390625
    %v473 = vmul.f32 %v472, %v472
    %v475 = vrot.slane %v473, 7
    %v477 = vsub.f32 %v472, %v475
    %v478 = vperm.slane %v472, 0
    %v479 = vsub.f32 %v363, %v478
    %v480 = vsub.f32 %v364, %v478
    %v481 = vsub.f32 %v365, %v478
    %v482 = vadd.f32 %v477, 1e-05
    %v483 = vrsqrt.pop %v482
    %v484 = vmul.f32 %v483, %v482
    %v485 = vmul.f32 %v484, %v483
    %v486 = vmul.f32 0.5, %v485
    %v487 = vsub.f32 1.5, %v486
    %v488 = vmul.f32 %v483, %v487
    %vm489 = vweird.f32 %v482
    %vm490 = vweird.f32 %v483
    %vm491 = vmor %vm489, %vm490
    %v492 = vsel %vm491, %v483, %v488
    %v493 = vperm.slane %v492, 1
    %v494 = vmul.f32 %v479, %v493
    %v495 = vmul.f32 %v480, %v493
    %v496 = vmul.f32 %v481, %v493
    %v497 = vmax.f32 %v494, 0.0
    %v498 = vmax.f32 %v495, 0.0
    %v499 = vmax.f32 %v496, 0.0
    %500 = vst [vmem:[#allocation2] sm:$0x1] 0.0
    %501 = vst [vmem:[#allocation2 + $0x1] sm:$0xff] %v419
    %502 = vst [vmem:[#allocation2 + $0x9] sm:$0xff] %v420
    %503 = vst [vmem:[#allocation2 + $0x11] sm:$0x1] 0.0
    %504 = vst [vmem:[#allocation2 + $0x12] sm:$0x1] 0.0
    %505 = vst [vmem:[#allocation2 + $0x11] sm:$0xfc] %v497
    %506 = vst [vmem:[#allocation2 + $0x19] sm:$0xff] %v498
    %507 = vst [vmem:[#allocation2 + $0x21] sm:$0x3] %v499
    %508 = vst [vmem:[#allocation2 + $0x23] sm:$0x1] 0.0
    %v509 = vld [vmem:[#allocation2] sm:$0xff]
    %v510 = vld [vmem:[#allocation2 + $0x8] sm:$0xff]
    %v511 = vld [vmem:[#allocation2 + $0x10] sm:$0xff]
    %v512 = vld [vmem:[#allocation2 + $0x18] sm:$0xff]
    %v513 = vld [vmem:[#allocation2 + $0x20] sm:$0x3]
    %v514 = vpack.c.bf16 %v510, %v509
    %v515 = vpack.c.bf16 %v512, %v511
    %v516 = vpack.c.bf16 %v513, %v513
    %v517 = vld [vmem:[#allocation2 + $0x1] sm:$0xff]
    %v518 = vld [vmem:[#allocation2 + $0x9] sm:$0xff]
    %v519 = vld [vmem:[#allocation2 + $0x11] sm:$0xff]
    %v520 = vld [vmem:[#allocation2 + $0x19] sm:$0xff]
    %v521 = vld [vmem:[#allocation2 + $0x21] sm:$0x3]
    %v522 = vpack.c.bf16 %v518, %v517
    %v523 = vpack.c.bf16 %v520, %v519
    %v524 = vpack.c.bf16 %v521, %v521
    %v525 = vld [vmem:[#allocation2 + $0x2] sm:$0xff]
    %v526 = vld [vmem:[#allocation2 + $0xa] sm:$0xff]
    %v527 = vld [vmem:[#allocation2 + $0x12] sm:$0xff]
    %v528 = vld [vmem:[#allocation2 + $0x1a] sm:$0xff]
    %v529 = vld [vmem:[#allocation2 + $0x22] sm:$0x3]
    %v530 = vpack.c.bf16 %v526, %v525
    %v531 = vpack.c.bf16 %v528, %v527
    %v532 = vpack.c.bf16 %v529, %v529
    %v533 = vld [vmem:[#allocation8] sm:$0xf]
    %v534 = vld [vmem:[#allocation8 + $0x4] sm:$0xf]
    %v535 = vld [vmem:[#allocation8 + $0x8] sm:$0xf]
    %v536 = vld [vmem:[#allocation8 + $0xc] sm:$0xf]
    %v537 = vld [vmem:[#allocation8 + $0x10] sm:$0xf]
    %v538 = vld [vmem:[#allocation8 + $0x14] sm:$0xf]
    %v539 = vld [vmem:[#allocation8 + $0x18] sm:$0xf]
    %v540 = vld [vmem:[#allocation8 + $0x1c] sm:$0xf]
    %v541 = vld [vmem:[#allocation8 + $0x20] sm:$0xf]
    %v542 = vld [vmem:[#allocation8 + $0x24] sm:$0xf]
    %v543 = vld [vmem:[#allocation8 + $0x28] sm:$0xf]
    %v544 = vld [vmem:[#allocation8 + $0x2c] sm:$0xf]
    %v545 = vld [vmem:[#allocation8 + $0x30] sm:$0xf]
    %v546 = vld [vmem:[#allocation8 + $0x34] sm:$0xf]
    %v547 = vld [vmem:[#allocation8 + $0x38] sm:$0xf]
    %v548 = vld [vmem:[#allocation8 + $0x3c] sm:$0xf]
    %s549 = scalar_lea.vmem [#allocation8], 64
    %v550 = vld [vmem:[%s549] sm:$0xf]
    %v551 = vld [vmem:[%s549 + $0x4] sm:$0xf]
    %v552 = vld [vmem:[%s549 + $0x8] sm:$0xf]
    %v553 = vld [vmem:[%s549 + $0xc] sm:$0xf]
    %v554 = vld [vmem:[%s549 + $0x10] sm:$0xf]
    %v555 = vld [vmem:[%s549 + $0x14] sm:$0xf]
    %v556 = vld [vmem:[%s549 + $0x18] sm:$0xf]
    %v557 = vld [vmem:[%s549 + $0x1c] sm:$0xf]
    %v558 = vld [vmem:[%s549 + $0x20] sm:$0xf]
    %v559 = vld [vmem:[%s549 + $0x24] sm:$0xf]
    %v560 = vld [vmem:[%s549 + $0x28] sm:$0xf]
    %v561 = vld [vmem:[%s549 + $0x2c] sm:$0xf]
    %v562 = vld [vmem:[%s549 + $0x30] sm:$0xf]
    %v563 = vld [vmem:[%s549 + $0x34] sm:$0xf]
    %v564 = vld [vmem:[%s549 + $0x38] sm:$0xf]
    %v565 = vld [vmem:[%s549 + $0x3c] sm:$0xf]
    %v582 = vunpack.c.l.b16 %v550
    %v583 = vunpack.c.l.b16 %v551
    %v584 = vunpack.c.l.b16 %v552
    %v585 = vunpack.c.l.b16 %v553
    %v586 = vunpack.c.l.b16 %v554
    %v587 = vunpack.c.l.b16 %v555
    %v588 = vunpack.c.l.b16 %v556
    %v589 = vunpack.c.l.b16 %v557
    %v590 = vunpack.c.l.b16 %v558
    %v591 = vunpack.c.l.b16 %v559
    %v592 = vunpack.c.l.b16 %v560
    %v593 = vunpack.c.l.b16 %v561
    %v594 = vunpack.c.l.b16 %v562
    %v595 = vunpack.c.l.b16 %v563
    %v596 = vunpack.c.l.b16 %v564
    %v597 = vunpack.c.l.b16 %v565
    %v598 = vpack.c.b16 %v583, %v582
    %v599 = vpack.c.b16 %v585, %v584
    %v600 = vpack.c.b16 %v587, %v586
    %v601 = vpack.c.b16 %v589, %v588
    %v602 = vpack.c.b16 %v591, %v590
    %v603 = vpack.c.b16 %v593, %v592
    %v604 = vpack.c.b16 %v595, %v594
    %v605 = vpack.c.b16 %v597, %v596
    %614 = vmatpush.bf16.msra.mxu0 %v605
    %615 = vmatpush.bf16.msra.mxu0 %v604
    %616 = vmatpush.bf16.msra.mxu0 %v603
    %617 = vmatpush.bf16.msra.mxu0 %v602
    %618 = vmatpush.bf16.msra.mxu0 %v601
    %619 = vmatpush.bf16.msra.mxu0 %v600
    %620 = vmatpush.bf16.msra.mxu0 %v599
    %621 = vmatpush.bf16.msra.mxu0 %v598
    %622 = vmatmul.bf16.gmra.mxu0 %v522
    %v623 = vpop.f32.mrf.mxu0
    %v624 = vadd.f32 0.0, %v623
    %v625 = vpop.f32.mrf.mxu0
    %v626 = vadd.f32 0.0, %v625
    %627 = vmatmul.bf16.gmra.mxu0 %v523
    %v628 = vpop.f32.mrf.mxu0
    %v629 = vadd.f32 0.0, %v628
    %v630 = vpop.f32.mrf.mxu0
    %v631 = vadd.f32 0.0, %v630
    %632 = vmatmul.bf16.gmra.mxu0 %v524
    %v633 = vpop.f32.mrf.mxu0
    %v634 = vadd.f32 0.0, %v633
    %v635 = vpop.f32.mrf.mxu0
    %636 = vdwg.mxu0
    %v653 = vunpack.c.l.b16 %v533
    %v654 = vunpack.c.l.b16 %v534
    %v655 = vunpack.c.l.b16 %v535
    %v656 = vunpack.c.l.b16 %v536
    %v657 = vunpack.c.l.b16 %v537
    %v658 = vunpack.c.l.b16 %v538
    %v659 = vunpack.c.l.b16 %v539
    %v660 = vunpack.c.l.b16 %v540
    %v661 = vunpack.c.l.b16 %v541
    %v662 = vunpack.c.l.b16 %v542
    %v663 = vunpack.c.l.b16 %v543
    %v664 = vunpack.c.l.b16 %v544
    %v665 = vunpack.c.l.b16 %v545
    %v666 = vunpack.c.l.b16 %v546
    %v667 = vunpack.c.l.b16 %v547
    %v668 = vunpack.c.l.b16 %v548
    %v669 = vpack.c.b16 %v654, %v653
    %v670 = vpack.c.b16 %v656, %v655
    %v671 = vpack.c.b16 %v658, %v657
    %v672 = vpack.c.b16 %v660, %v659
    %v673 = vpack.c.b16 %v662, %v661
    %v674 = vpack.c.b16 %v664, %v663
    %v675 = vpack.c.b16 %v666, %v665
    %v676 = vpack.c.b16 %v668, %v667
    %685 = vmatpush.bf16.msra.mxu0 %v676
    %686 = vmatpush.bf16.msra.mxu0 %v675
    %687 = vmatpush.bf16.msra.mxu0 %v674
    %688 = vmatpush.bf16.msra.mxu0 %v673
    %689 = vmatpush.bf16.msra.mxu0 %v672
    %690 = vmatpush.bf16.msra.mxu0 %v671
    %691 = vmatpush.bf16.msra.mxu0 %v670
    %692 = vmatpush.bf16.msra.mxu0 %v669
    %693 = vmatmul.bf16.gmra.mxu0 %v514
    %v694 = vpop.f32.mrf.mxu0
    %v695 = vadd.f32 %v624, %v694
    %v696 = vpop.f32.mrf.mxu0
    %v697 = vadd.f32 %v626, %v696
    %698 = vmatmul.bf16.gmra.mxu0 %v515
    %v699 = vpop.f32.mrf.mxu0
    %v700 = vadd.f32 %v629, %v699
    %v701 = vpop.f32.mrf.mxu0
    %v702 = vadd.f32 %v631, %v701
    %703 = vmatmul.bf16.gmra.mxu0 %v516
    %v704 = vpop.f32.mrf.mxu0
    %v705 = vadd.f32 %v634, %v704
    %v706 = vpop.f32.mrf.mxu0
    %707 = vdwg.mxu0
    %s708 = scalar_lea.vmem [#allocation8], 128
    %v709 = vld [vmem:[%s708] sm:$0xf]
    %v710 = vld [vmem:[%s708 + $0x4] sm:$0xf]
    %v711 = vld [vmem:[%s708 + $0x8] sm:$0xf]
    %v712 = vld [vmem:[%s708 + $0xc] sm:$0xf]
    %v713 = vld [vmem:[%s708 + $0x10] sm:$0xf]
    %v714 = vld [vmem:[%s708 + $0x14] sm:$0xf]
    %v715 = vld [vmem:[%s708 + $0x18] sm:$0xf]
    %v716 = vld [vmem:[%s708 + $0x1c] sm:$0xf]
    %v717 = vld [vmem:[%s708 + $0x20] sm:$0xf]
    %v718 = vld [vmem:[%s708 + $0x24] sm:$0xf]
    %v719 = vld [vmem:[%s708 + $0x28] sm:$0xf]
    %v720 = vld [vmem:[%s708 + $0x2c] sm:$0xf]
    %v721 = vld [vmem:[%s708 + $0x30] sm:$0xf]
    %v722 = vld [vmem:[%s708 + $0x34] sm:$0xf]
    %v723 = vld [vmem:[%s708 + $0x38] sm:$0xf]
    %v724 = vld [vmem:[%s708 + $0x3c] sm:$0xf]
    %v741 = vunpack.c.l.b16 %v709
    %v742 = vunpack.c.l.b16 %v710
    %v743 = vunpack.c.l.b16 %v711
    %v744 = vunpack.c.l.b16 %v712
    %v745 = vunpack.c.l.b16 %v713
    %v746 = vunpack.c.l.b16 %v714
    %v747 = vunpack.c.l.b16 %v715
    %v748 = vunpack.c.l.b16 %v716
    %v749 = vunpack.c.l.b16 %v717
    %v750 = vunpack.c.l.b16 %v718
    %v751 = vunpack.c.l.b16 %v719
    %v752 = vunpack.c.l.b16 %v720
    %v753 = vunpack.c.l.b16 %v721
    %v754 = vunpack.c.l.b16 %v722
    %v755 = vunpack.c.l.b16 %v723
    %v756 = vunpack.c.l.b16 %v724
    %v757 = vpack.c.b16 %v742, %v741
    %v758 = vpack.c.b16 %v744, %v743
    %v759 = vpack.c.b16 %v746, %v745
    %v760 = vpack.c.b16 %v748, %v747
    %v761 = vpack.c.b16 %v750, %v749
    %v762 = vpack.c.b16 %v752, %v751
    %v763 = vpack.c.b16 %v754, %v753
    %v764 = vpack.c.b16 %v756, %v755
    %773 = vmatpush.bf16.msra.mxu0 %v764
    %774 = vmatpush.bf16.msra.mxu0 %v763
    %775 = vmatpush.bf16.msra.mxu0 %v762
    %776 = vmatpush.bf16.msra.mxu0 %v761
    %777 = vmatpush.bf16.msra.mxu0 %v760
    %778 = vmatpush.bf16.msra.mxu0 %v759
    %779 = vmatpush.bf16.msra.mxu0 %v758
    %780 = vmatpush.bf16.msra.mxu0 %v757
    %781 = vmatmul.bf16.gmra.mxu0 %v530
    %v782 = vpop.f32.mrf.mxu0
    %v783 = vadd.f32 0.0, %v782
    %v784 = vpop.f32.mrf.mxu0
    %v785 = vadd.f32 0.0, %v784
    %786 = vmatmul.bf16.gmra.mxu0 %v531
    %v787 = vpop.f32.mrf.mxu0
    %v788 = vadd.f32 0.0, %v787
    %v789 = vpop.f32.mrf.mxu0
    %v790 = vadd.f32 0.0, %v789
    %791 = vmatmul.bf16.gmra.mxu0 %v532
    %v792 = vpop.f32.mrf.mxu0
    %v793 = vadd.f32 0.0, %v792
    %v794 = vpop.f32.mrf.mxu0
    %795 = vdwg.mxu0
    %v796 = vadd.f32 %v695, %v783
    %v797 = vadd.f32 %v697, %v785
    %v798 = vadd.f32 %v700, %v788
    %v799 = vadd.f32 %v702, %v790
    %v800 = vadd.f32 %v705, %v793
    %v801 = vadd.f32 %v796, %v797
    %v802 = vrot.slane %v801, 4
    %v803 = vadd.f32 %v801, %v802
    %v804 = vrot.slane %v803, 2
    %v805 = vadd.f32 %v803, %v804
    %v806 = vrot.slane %v805, 1
    %v807 = vadd.f32 %v805, %v806
    %v808 = vmul.f32 %v796, %v796
    %v809 = vmul.f32 %v797, %v797
    %v810 = vadd.f32 %v808, %v809
    %v811 = vrot.slane %v810, 4
    %v812 = vadd.f32 %v810, %v811
    %v813 = vrot.slane %v812, 2
    %v814 = vadd.f32 %v812, %v813
    %v815 = vrot.slane %v814, 1
    %v816 = vadd.f32 %v814, %v815
    %v817 = vsel %vm382, %v807, %v816
    %818 = vrot.lane.b32.xlu0 %v817, 8
    %v819 = vpop.permute.xlu0 %818
    %v820 = vadd.f32 %v817, %v819
    %821 = vrot.lane.b32.xlu0 %v820, 16
    %v822 = vpop.permute.xlu0 %821
    %v823 = vadd.f32 %v820, %v822
    %824 = vrot.lane.b32.xlu0 %v823, 32
    %v825 = vpop.permute.xlu0 %824
    %v826 = vadd.f32 %v823, %v825
    %827 = vrot.lane.b32.xlu0 %v826, 64
    %v828 = vpop.permute.xlu0 %827
    %v829 = vadd.f32 %v826, %v828
    %v830 = vmul.f32 %v829, 0.00390625
    %v831 = vmul.f32 %v830, %v830
    %v833 = vrot.slane %v831, 7
    %v835 = vsub.f32 %v830, %v833
    %v836 = vperm.slane %v830, 0
    %v837 = vsub.f32 %v796, %v836
    %v838 = vsub.f32 %v797, %v836
    %v839 = vadd.f32 %v835, 1e-05
    %v840 = vrsqrt.pop %v839
    %v841 = vmul.f32 %v840, %v839
    %v842 = vmul.f32 %v841, %v840
    %v843 = vmul.f32 0.5, %v842
    %v844 = vsub.f32 1.5, %v843
    %v845 = vmul.f32 %v840, %v844
    %vm846 = vweird.f32 %v839
    %vm847 = vweird.f32 %v840
    %vm848 = vmor %vm846, %vm847
    %v849 = vsel %vm848, %v840, %v845
    %v850 = vperm.slane %v849, 1
    %v851 = vmul.f32 %v837, %v850
    %v852 = vmul.f32 %v838, %v850
    %v853 = vadd.f32 %v62, %v851
    %v854 = vadd.f32 %v63, %v852
    %855 = vst [vmem:[#allocation9] sm:$0xff] %v853
    %856 = vst [vmem:[#allocation9 + $0x8] sm:$0xff] %v854
    %v860 = vrot.slane %v798, 2
    %v861 = vrot.slane %v799, 2
    %v862 = vsel %vm424, %v860, %v861
    %v863 = vrot.slane %v800, 2
    %v864 = vsel %vm424, %v861, %v863
    %v867 = vadd.f32 %v862, %v864
    %v868 = vrot.slane %v867, 4
    %v869 = vadd.f32 %v867, %v868
    %v870 = vrot.slane %v869, 2
    %v871 = vadd.f32 %v869, %v870
    %v872 = vrot.slane %v871, 1
    %v873 = vadd.f32 %v871, %v872
    %v874 = vmul.f32 %v798, %v798
    %v875 = vmul.f32 %v799, %v799
    %v876 = vmul.f32 %v800, %v800
    %v880 = vrot.slane %v874, 2
    %v881 = vrot.slane %v875, 2
    %v882 = vsel %vm424, %v880, %v881
    %v883 = vrot.slane %v876, 2
    %v884 = vsel %vm424, %v881, %v883
    %v887 = vadd.f32 %v882, %v884
    %v888 = vrot.slane %v887, 4
    %v889 = vadd.f32 %v887, %v888
    %v890 = vrot.slane %v889, 2
    %v891 = vadd.f32 %v889, %v890
    %v892 = vrot.slane %v891, 1
    %v893 = vadd.f32 %v891, %v892
    %v894 = vsel %vm382, %v873, %v893
    %895 = vrot.lane.b32.xlu0 %v894, 8
    %v896 = vpop.permute.xlu0 %895
    %v897 = vadd.f32 %v894, %v896
    %898 = vrot.lane.b32.xlu0 %v897, 16
    %v899 = vpop.permute.xlu0 %898
    %v900 = vadd.f32 %v897, %v899
    %901 = vrot.lane.b32.xlu0 %v900, 32
    %v902 = vpop.permute.xlu0 %901
    %v903 = vadd.f32 %v900, %v902
    %904 = vrot.lane.b32.xlu0 %v903, 64
    %v905 = vpop.permute.xlu0 %904
    %v906 = vadd.f32 %v903, %v905
    %v907 = vmul.f32 %v906, 0.00390625
    %v908 = vmul.f32 %v907, %v907
    %v910 = vrot.slane %v908, 7
    %v912 = vsub.f32 %v907, %v910
    %v913 = vperm.slane %v907, 0
    %v914 = vsub.f32 %v798, %v913
    %v915 = vsub.f32 %v799, %v913
    %v916 = vsub.f32 %v800, %v913
    %v917 = vadd.f32 %v912, 1e-05
    %v918 = vrsqrt.pop %v917
    %v919 = vmul.f32 %v918, %v917
    %v920 = vmul.f32 %v919, %v918
    %v921 = vmul.f32 0.5, %v920
    %v922 = vsub.f32 1.5, %v921
    %v923 = vmul.f32 %v918, %v922
    %vm924 = vweird.f32 %v917
    %vm925 = vweird.f32 %v918
    %vm926 = vmor %vm924, %vm925
    %v927 = vsel %vm926, %v918, %v923
    %v928 = vperm.slane %v927, 1
    %v929 = vmul.f32 %v914, %v928
    %v930 = vmul.f32 %v915, %v928
    %v931 = vmul.f32 %v916, %v928
    %v935 = vrot.slane %v929, 2
    %v936 = vrot.slane %v930, 2
    %v937 = vsel %vm424, %v935, %v936
    %v938 = vrot.slane %v931, 2
    %v939 = vsel %vm424, %v936, %v938
    %v942 = vadd.f32 %v64, %v937
    %v943 = vadd.f32 %v65, %v939
    %s944 = scalar_lea.vmem [#allocation9], 16
    %945 = vst [vmem:[%s944] sm:$0xff] %v942
    %946 = vst [vmem:[%s944 + $0x8] sm:$0xff] %v943
    // Predicated region
    $region26: #{tpu_custom_call.1} parent=1 // pred_check
      _
    $region27: #{tpu_custom_call.1} parent=1 // pred_check_branch
      %948 = sbr.rel (0) target = $region29
    $region28: #{tpu_custom_call.1} parent=1 // pred_region
      %950 = vsyncadd [#allocation5], 0
      %s951 = sshll.u32 [#allocation9], 4
      %s952 = int_to_ptr.vmem [resolvable:$true] %s951
      %s953 = sshll.u32 %s3, 4
      %s954 = int_to_ptr.hbm [resolvable:$true] %s953
      %959 = dma.vmem_to_hbm [thread:$0]  %s952, 512, %s954, [#allocation5], 128, 128, 8
    $region29: #{tpu_custom_call.1} parent=1 // pred_fallthru
      _
    // Predicated region
    $region30: #{tpu_custom_call.1} parent=1 // pred_check
      _
    $region31: #{tpu_custom_call.1} parent=1 // pred_check_branch
      %961 = sbr.rel (0) target = $region33
    $region32: #{tpu_custom_call.1} parent=1 // pred_region
      %963 = dma.done [#allocation5], 512
    $region33: #{tpu_custom_call.1} parent=1 // pred_fallthru
      _
    %964 = vsyncpa [#allocation4], 1
    %965 = vsyncpa [#allocation7], 1
    %966 = vsyncpa [#allocation5], 1

</llo_original>
